<compile_context>
chip_gen: v7x
topology: tpu7x:2x2x1
jax: 0.10.0
libtpu: 0.0.40
codegen_flags: <defaults>
</compile_context>

<pallas_src>
import functools

import jax
import jax.numpy as jnp
from jax import lax
from jax.experimental import pallas as pl
from jax.experimental.pallas import tpu as pltpu


# VMEM ceiling: leave headroom vs v7x's 64 MiB physical VMEM; well above the
# 16/32 MiB default scoped limits on v5e/v6e so >=256-wide tiles pipeline.
_VMEM_LIMIT_BYTES = 48 * 1024 * 1024

# Tile targets sized for the 256x256 MXUs on v6e/v7x (128 would also be fine
# on v5e's 4x128x128 MXU, but 256 keeps the larger MXUs full).
_TM_TARGET = 256
_TN_TARGET = 256
_TK_TARGET = 512


def _pick_tile(dim, target, align):
    """Largest tile <= target that is a multiple of `align` and divides `dim`.

    Falls back to the full dimension (always legal: block == array extent).
    """
    if dim <= target:
        return dim
    t = (target // align) * align
    while t >= align:
        if dim % t == 0:
            return t
        t -= align
    return dim


# ----------------------------------------------------------------------------
# Tiled linear kernels (bf16 MXU operands, f32 accumulation)
# ----------------------------------------------------------------------------
def _matmul_kernel(x_ref, w_ref, o_ref, acc_ref):
    @pl.when(pl.program_id(2) == 0)
    def _init():
        acc_ref[...] = jnp.zeros_like(acc_ref)

    acc_ref[...] += jnp.dot(
        x_ref[...].astype(jnp.bfloat16),
        w_ref[...].astype(jnp.bfloat16),
        preferred_element_type=jnp.float32,
    )

    @pl.when(pl.program_id(2) == pl.num_programs(2) - 1)
    def _store():
        o_ref[...] = acc_ref[...].astype(o_ref.dtype)


def _matmul_bias_kernel(x_ref, w_ref, b_ref, o_ref, acc_ref):
    @pl.when(pl.program_id(2) == 0)
    def _init():
        acc_ref[...] = jnp.zeros_like(acc_ref)

    acc_ref[...] += jnp.dot(
        x_ref[...].astype(jnp.bfloat16),
        w_ref[...].astype(jnp.bfloat16),
        preferred_element_type=jnp.float32,
    )

    @pl.when(pl.program_id(2) == pl.num_programs(2) - 1)
    def _store():
        acc = acc_ref[...] + b_ref[...].astype(jnp.float32)
        o_ref[...] = acc.astype(o_ref.dtype)


def _linear(x2d, w, b=None, out_dtype=None):
    """y = x2d @ w (+ b) as a tiled, pipelined Pallas matmul."""
    M, K = x2d.shape
    N = w.shape[1]
    out_dtype = out_dtype or x2d.dtype

    tm = _pick_tile(M, _TM_TARGET, 8)     # second-minor: mult of 8 or full
    tn = _pick_tile(N, _TN_TARGET, 128)   # minor: mult of 128 or full
    tk = _pick_tile(K, _TK_TARGET, 128)   # minor of x / second-minor of w
    grid = (M // tm, N // tn, K // tk)

    in_specs = [
        pl.BlockSpec((tm, tk), lambda i, j, k: (i, k)),
        pl.BlockSpec((tk, tn), lambda i, j, k: (k, j)),
    ]
    operands = [x2d, w]
    kernel = _matmul_kernel
    if b is not None:
        in_specs.append(pl.BlockSpec((1, tn), lambda i, j, k: (0, j)))
        operands.append(b.reshape(1, N))
        kernel = _matmul_bias_kernel

    return pl.pallas_call(
        kernel,
        grid=grid,
        in_specs=in_specs,
        out_specs=pl.BlockSpec((tm, tn), lambda i, j, k: (i, j)),
        out_shape=jax.ShapeDtypeStruct((M, N), out_dtype),
        scratch_shapes=[pltpu.VMEM((tm, tn), jnp.float32)],
        compiler_params=pltpu.CompilerParams(
            dimension_semantics=("parallel", "parallel", "arbitrary"),
            vmem_limit_bytes=_VMEM_LIMIT_BYTES,
        ),
    )(*operands)


# ----------------------------------------------------------------------------
# Attention kernel: one batch element per grid step, all heads in-kernel.
# ----------------------------------------------------------------------------
def _attention_kernel(qkv_ref, o_ref, attn_ref, *, num_heads, head_dim, scale):
    # qkv_ref: (1, N, 3C) laid out as [q | k | v], each C = H*D columns.
    # o_ref:   (1, N, C)   lane-dense output in (B, N, C) layout.
    # attn_ref:(1, H, N, N) softmax probabilities.
    C = num_heads * head_dim
    qkv = qkv_ref[0]  # (N, 3C)

    o_heads = []
    for h in range(num_heads):  # static unroll over heads
        q = qkv[:, h * head_dim:(h + 1) * head_dim]
        k = qkv[:, C + h * head_dim:C + (h + 1) * head_dim]
        v = qkv[:, 2 * C + h * head_dim:2 * C + (h + 1) * head_dim]

        # Fold scale into q (N*D elems) instead of scaling the N*N scores.
        q = (q.astype(jnp.float32) * scale).astype(jnp.bfloat16)
        k = k.astype(jnp.bfloat16)
        v = v.astype(jnp.bfloat16)

        # q @ k^T via dot_general contracting the last dims (no XLU transpose).
        s = lax.dot_general(
            q, k,
            dimension_numbers=(((1,), (1,)), ((), ())),
            preferred_element_type=jnp.float32,
        )  # (N, N), f32

        # Softmax in f32 (v5e VPU/EUP have no bf16 path).
        m = jnp.max(s, axis=-1, keepdims=True)
        p = jnp.exp(s - m)
        p = p * pl.reciprocal(jnp.sum(p, axis=-1, keepdims=True), approx=True)

        attn_ref[0, h] = p.astype(attn_ref.dtype)

        o_heads.append(
            jnp.dot(p.astype(jnp.bfloat16), v,
                    preferred_element_type=jnp.float32)
        )  # (N, D)

    # Single lane-dense store of all heads: (N, C) in (B, N, C) layout.
    o_ref[0] = jnp.concatenate(o_heads, axis=-1).astype(o_ref.dtype)


# ----------------------------------------------------------------------------
# Forward pass
# ----------------------------------------------------------------------------
def attention_forward(x, params, num_heads, attn_dtype=jnp.float32):
    """Pallas implementation of Attention.forward.

    x: (B, N, C)
    returns: (out (B, N, C), attn (B, num_heads, N, N))
    """
    B, N, C = x.shape
    H = num_heads
    D = C // H
    scale = D ** (-0.5)

    # ---- qkv projection (no bias); bf16 activation to halve HBM traffic ----
    qkv = _linear(x.reshape(B * N, C), params["w_qkv"],
                  out_dtype=jnp.bfloat16)               # (B*N, 3C)
    qkv = qkv.reshape(B, N, 3 * C)                      # free reshape, no transpose

    # ---- scaled dot-product attention, grid over batch -----------------
    # TODO(synk): for very large N (high-res DINO, N >~ 1K) switch to a
    # flash-attention variant that streams K/V tiles and skips the N x N attn
    # output; here attn is part of the module's return contract.
    kernel = functools.partial(
        _attention_kernel, num_heads=H, head_dim=D, scale=scale)

    o, attn = pl.pallas_call(
        kernel,
        grid=(B,),
        in_specs=[pl.BlockSpec((1, N, 3 * C), lambda b: (b, 0, 0))],
        out_specs=(
            pl.BlockSpec((1, N, C), lambda b: (b, 0, 0)),
            pl.BlockSpec((1, H, N, N), lambda b: (b, 0, 0, 0)),
        ),
        out_shape=(
            jax.ShapeDtypeStruct((B, N, C), jnp.bfloat16),
            jax.ShapeDtypeStruct((B, H, N, N), attn_dtype),
        ),
        compiler_params=pltpu.CompilerParams(
            dimension_semantics=("parallel",),
            vmem_limit_bytes=_VMEM_LIMIT_BYTES,
        ),
    )(qkv)

    # ---- output projection (with bias), back to x.dtype ----------------
    out = _linear(o.reshape(B * N, C), params["w_proj"], params["b_proj"],
                  out_dtype=x.dtype)
    out = out.reshape(B, N, C)

    # attn_drop / proj_drop are identity (p=0.0 / eval mode)
    return out, attn


def init_params(key, dim):
    """Deterministic synthetic parameter init (matches nn.Linear shapes)."""
    k1, k2, k3 = jax.random.split(key, 3)
    std = dim ** (-0.5)
    return {
        # stored as (in, out) so kernels do x @ W
        "w_qkv": jax.random.normal(k1, (dim, 3 * dim), jnp.float32) * std,
        "w_proj": jax.random.normal(k2, (dim, dim), jnp.float32) * std,
        "b_proj": jax.random.normal(k3, (dim,), jnp.float32) * 0.02,
    }


# ----------------------------------------------------------------------------
# Main
# ----------------------------------------------------------------------------
if __name__ == "__main__":
    B, N, C = 2, 8, 32
    num_heads = 4  # head_dim = 8

    key = jax.random.PRNGKey(0)
    kx, kp = jax.random.split(key)
    x = jax.random.normal(kx, (B, N, C), jnp.float32)
    params = init_params(kp, C)

    fwd = jax.jit(functools.partial(attention_forward, num_heads=num_heads))
    out, attn = fwd(x, params)
    jax.block_until_ready(out)
    jax.block_until_ready(attn)

    # Lightweight sanity check against a pure-JAX f32 reference.
    # (Tolerances loosened because MXU operands are bf16.)
    def ref(x, p):
        Bb, Nn, Cc = x.shape
        D = Cc // num_heads
        qkv = (x.reshape(Bb * Nn, Cc) @ p["w_qkv"]).reshape(
            Bb, Nn, 3, num_heads, D)
        qkv = jnp.transpose(qkv, (2, 0, 3, 1, 4))
        q, k, v = qkv[0], qkv[1], qkv[2]
        s = jnp.einsum("bhqd,bhkd->bhqk", q, k) * (D ** -0.5)
        a = jax.nn.softmax(s, axis=-1)
        o = jnp.einsum("bhqk,bhkd->bhqd", a, v)
        o = jnp.transpose(o, (0, 2, 1, 3)).reshape(Bb, Nn, Cc)
        o = o.reshape(Bb * Nn, Cc) @ p["w_proj"] + p["b_proj"]
        return o.reshape(Bb, Nn, Cc), a

    ref_out, ref_attn = ref(x, params)
    assert jnp.allclose(out, ref_out, atol=5e-2, rtol=5e-2)
    assert jnp.allclose(attn.astype(jnp.float32), ref_attn, atol=5e-2, rtol=5e-2)

    print("KERNEL_OK")
</pallas_src>

<mosaic_0001>
module attributes {stable_mosaic.version = 11 : i64} {
  func.func @_matmul_kernel(%arg0: i32, %arg1: i32, %arg2: i32, %arg3: memref<16x32xf32, #tpu.memory_space<vmem>>, %arg4: memref<32x96xf32, #tpu.memory_space<vmem>>, %arg5: memref<16x96xbf16, #tpu.memory_space<vmem>>, %arg6: memref<16x96xf32, #tpu.memory_space<vmem>>) attributes {dimension_semantics = [#tpu.dimension_semantics<parallel>, #tpu.dimension_semantics<parallel>, #tpu.dimension_semantics<arbitrary>], iteration_bounds = array<i64: 1, 1, 1>, scalar_prefetch = 0 : i64, scratch_operands = 1 : i64, tpu.core_type = #tpu.core_type<tc>, window_params = [{transform_indices = @transform_0, window_bounds = array<i64: 16, 32>}, {transform_indices = @transform_1, window_bounds = array<i64: 32, 96>}, {transform_indices = @transform_2, window_bounds = array<i64: 16, 96>}]} {
    %c0_i32 = arith.constant 0 : i32
    %0 = arith.cmpi eq, %arg2, %c0_i32 : i32
    %1 = arith.extui %0 : i1 to i32
    %c0_i32_0 = arith.constant 0 : i32
    %2 = arith.cmpi ne, %1, %c0_i32_0 : i32
    scf.if %2 {
      %cst_10 = arith.constant 0.000000e+00 : f32
      %14 = vector.broadcast %cst_10 : f32 to vector<16x96xf32>
      %c0_11 = arith.constant 0 : index
      %c0_12 = arith.constant 0 : index
      %15 = vector.load %arg6[%c0_11, %c0_12] : memref<16x96xf32, #tpu.memory_space<vmem>>, vector<16x96xf32>
      tpu.vector_store %arg6[%c0_11, %c0_12], %14 {strides = array<i32>} : memref<16x96xf32, #tpu.memory_space<vmem>>, vector<16x96xf32>,
    } else {
    }
    %c0 = arith.constant 0 : index
    %c0_1 = arith.constant 0 : index
    %3 = vector.load %arg6[%c0, %c0_1] : memref<16x96xf32, #tpu.memory_space<vmem>>, vector<16x96xf32>
    %c0_2 = arith.constant 0 : index
    %c0_3 = arith.constant 0 : index
    %4 = vector.load %arg3[%c0_2, %c0_3] : memref<16x32xf32, #tpu.memory_space<vmem>>, vector<16x32xf32>
    %5 = arith.truncf %4 : vector<16x32xf32> to vector<16x32xbf16>
    %c0_4 = arith.constant 0 : index
    %c0_5 = arith.constant 0 : index
    %6 = vector.load %arg4[%c0_4, %c0_5] : memref<32x96xf32, #tpu.memory_space<vmem>>, vector<32x96xf32>
    %7 = arith.truncf %6 : vector<32x96xf32> to vector<32x96xbf16>
    %cst = arith.constant dense<0.000000e+00> : vector<16x96xf32>
    %8 = tpu.matmul %5, %7, %cst {dimension_numbers = #tpu.dot_dimension_numbers<[1], [0], [0], [1], [0, 0, 1, 1], [], []>} : vector<16x32xbf16>, vector<32x96xbf16>, vector<16x96xf32> -> vector<16x96xf32>
    %9 = arith.addf %3, %8 : vector<16x96xf32>
    %c0_6 = arith.constant 0 : index
    %c0_7 = arith.constant 0 : index
    %10 = vector.load %arg6[%c0_6, %c0_7] : memref<16x96xf32, #tpu.memory_space<vmem>>, vector<16x96xf32>
    tpu.vector_store %arg6[%c0_6, %c0_7], %9 {strides = array<i32>} : memref<16x96xf32, #tpu.memory_space<vmem>>, vector<16x96xf32>,
    %c0_i32_8 = arith.constant 0 : i32
    %11 = arith.cmpi eq, %arg2, %c0_i32_8 : i32
    %12 = arith.extui %11 : i1 to i32
    %c0_i32_9 = arith.constant 0 : i32
    %13 = arith.cmpi ne, %12, %c0_i32_9 : i32
    scf.if %13 {
      %c0_10 = arith.constant 0 : index
      %c0_11 = arith.constant 0 : index
      %14 = vector.load %arg6[%c0_10, %c0_11] : memref<16x96xf32, #tpu.memory_space<vmem>>, vector<16x96xf32>
      %15 = arith.truncf %14 : vector<16x96xf32> to vector<16x96xbf16>
      %c0_12 = arith.constant 0 : index
      %c0_13 = arith.constant 0 : index
      %16 = vector.load %arg5[%c0_12, %c0_13] : memref<16x96xbf16, #tpu.memory_space<vmem>>, vector<16x96xbf16>
      tpu.vector_store %arg5[%c0_12, %c0_13], %15 {strides = array<i32>} : memref<16x96xbf16, #tpu.memory_space<vmem>>, vector<16x96xbf16>,
    } else {
    }
    return
  }
  func.func @transform_0(%arg0: i32, %arg1: i32, %arg2: i32) -> (i32, i32) {
    %c0_i32 = arith.constant 0 : i32
    return %arg0, %arg2 : i32, i32
  }
  func.func @transform_1(%arg0: i32, %arg1: i32, %arg2: i32) -> (i32, i32) {
    %c0_i32 = arith.constant 0 : i32
    return %arg2, %arg1 : i32, i32
  }
  func.func @transform_2(%arg0: i32, %arg1: i32, %arg2: i32) -> (i32, i32) {
    %c0_i32 = arith.constant 0 : i32
    return %arg0, %arg1 : i32, i32
  }
}

module attributes {stable_mosaic.version = 11 : i64} {
  func.func @_matmul_bias_kernel(%arg0: i32, %arg1: i32, %arg2: i32, %arg3: memref<16x32xbf16, #tpu.memory_space<vmem>>, %arg4: memref<32x32xf32, #tpu.memory_space<vmem>>, %arg5: memref<1x32xf32, #tpu.memory_space<vmem>>, %arg6: memref<16x32xf32, #tpu.memory_space<vmem>>, %arg7: memref<16x32xf32, #tpu.memory_space<vmem>>) attributes {dimension_semantics = [#tpu.dimension_semantics<parallel>, #tpu.dimension_semantics<parallel>, #tpu.dimension_semantics<arbitrary>], iteration_bounds = array<i64: 1, 1, 1>, scalar_prefetch = 0 : i64, scratch_operands = 1 : i64, tpu.core_type = #tpu.core_type<tc>, window_params = [{transform_indices = @transform_0, window_bounds = array<i64: 16, 32>}, {transform_indices = @transform_1, window_bounds = array<i64: 32, 32>}, {transform_indices = @transform_2, window_bounds = array<i64: 1, 32>}, {transform_indices = @transform_3, window_bounds = array<i64: 16, 32>}]} {
    %c0_i32 = arith.constant 0 : i32
    %0 = arith.cmpi eq, %arg2, %c0_i32 : i32
    %1 = arith.extui %0 : i1 to i32
    %c0_i32_0 = arith.constant 0 : i32
    %2 = arith.cmpi ne, %1, %c0_i32_0 : i32
    scf.if %2 {
      %cst_10 = arith.constant 0.000000e+00 : f32
      %13 = vector.broadcast %cst_10 : f32 to vector<16x32xf32>
      %c0_11 = arith.constant 0 : index
      %c0_12 = arith.constant 0 : index
      %14 = vector.load %arg7[%c0_11, %c0_12] : memref<16x32xf32, #tpu.memory_space<vmem>>, vector<16x32xf32>
      tpu.vector_store %arg7[%c0_11, %c0_12], %13 {strides = array<i32>} : memref<16x32xf32, #tpu.memory_space<vmem>>, vector<16x32xf32>,
    } else {
    }
    %c0 = arith.constant 0 : index
    %c0_1 = arith.constant 0 : index
    %3 = vector.load %arg7[%c0, %c0_1] : memref<16x32xf32, #tpu.memory_space<vmem>>, vector<16x32xf32>
    %c0_2 = arith.constant 0 : index
    %c0_3 = arith.constant 0 : index
    %4 = vector.load %arg3[%c0_2, %c0_3] : memref<16x32xbf16, #tpu.memory_space<vmem>>, vector<16x32xbf16>
    %c0_4 = arith.constant 0 : index
    %c0_5 = arith.constant 0 : index
    %5 = vector.load %arg4[%c0_4, %c0_5] : memref<32x32xf32, #tpu.memory_space<vmem>>, vector<32x32xf32>
    %6 = arith.truncf %5 : vector<32x32xf32> to vector<32x32xbf16>
    %cst = arith.constant dense<0.000000e+00> : vector<16x32xf32>
    %7 = tpu.matmul %4, %6, %cst {dimension_numbers = #tpu.dot_dimension_numbers<[1], [0], [0], [1], [0, 0, 1, 1], [], []>} : vector<16x32xbf16>, vector<32x32xbf16>, vector<16x32xf32> -> vector<16x32xf32>
    %8 = arith.addf %3, %7 : vector<16x32xf32>
    %c0_6 = arith.constant 0 : index
    %c0_7 = arith.constant 0 : index
    %9 = vector.load %arg7[%c0_6, %c0_7] : memref<16x32xf32, #tpu.memory_space<vmem>>, vector<16x32xf32>
    tpu.vector_store %arg7[%c0_6, %c0_7], %8 {strides = array<i32>} : memref<16x32xf32, #tpu.memory_space<vmem>>, vector<16x32xf32>,
    %c0_i32_8 = arith.constant 0 : i32
    %10 = arith.cmpi eq, %arg2, %c0_i32_8 : i32
    %11 = arith.extui %10 : i1 to i32
    %c0_i32_9 = arith.constant 0 : i32
    %12 = arith.cmpi ne, %11, %c0_i32_9 : i32
    scf.if %12 {
      %c0_10 = arith.constant 0 : index
      %c0_11 = arith.constant 0 : index
      %13 = vector.load %arg7[%c0_10, %c0_11] : memref<16x32xf32, #tpu.memory_space<vmem>>, vector<16x32xf32>
      %c0_12 = arith.constant 0 : index
      %c0_13 = arith.constant 0 : index
      %14 = vector.load %arg5[%c0_12, %c0_13] : memref<1x32xf32, #tpu.memory_space<vmem>>, vector<1x32xf32>
      %15 = vector.broadcast %14 : vector<1x32xf32> to vector<16x32xf32>
      %16 = arith.addf %13, %15 : vector<16x32xf32>
      %c0_14 = arith.constant 0 : index
      %c0_15 = arith.constant 0 : index
      %17 = vector.load %arg6[%c0_14, %c0_15] : memref<16x32xf32, #tpu.memory_space<vmem>>, vector<16x32xf32>
      tpu.vector_store %arg6[%c0_14, %c0_15], %16 {strides = array<i32>} : memref<16x32xf32, #tpu.memory_space<vmem>>, vector<16x32xf32>,
    } else {
    }
    return
  }
  func.func @transform_0(%arg0: i32, %arg1: i32, %arg2: i32) -> (i32, i32) {
    %c0_i32 = arith.constant 0 : i32
    return %arg0, %arg2 : i32, i32
  }
  func.func @transform_1(%arg0: i32, %arg1: i32, %arg2: i32) -> (i32, i32) {
    %c0_i32 = arith.constant 0 : i32
    return %arg2, %arg1 : i32, i32
  }
  func.func @transform_2(%arg0: i32, %arg1: i32, %arg2: i32) -> (i32, i32) {
    %c0_i32 = arith.constant 0 : i32
    %c0_i32_0 = arith.constant 0 : i32
    return %c0_i32, %arg1 : i32, i32
  }
  func.func @transform_3(%arg0: i32, %arg1: i32, %arg2: i32) -> (i32, i32) {
    %c0_i32 = arith.constant 0 : i32
    return %arg0, %arg1 : i32, i32
  }
}

module attributes {stable_mosaic.version = 11 : i64} {
  func.func @_attention_kernel(%arg0: i32, %arg1: memref<1x8x96xbf16, #tpu.memory_space<vmem>>, %arg2: memref<1x8x32xbf16, #tpu.memory_space<vmem>>, %arg3: memref<1x4x8x8xf32, #tpu.memory_space<vmem>>) attributes {dimension_semantics = [#tpu.dimension_semantics<parallel>], iteration_bounds = array<i64: 2>, scalar_prefetch = 0 : i64, scratch_operands = 0 : i64, tpu.core_type = #tpu.core_type<tc>, window_params = [{transform_indices = @transform_0, window_bounds = array<i64: 1, 8, 96>}, {transform_indices = @transform_1, window_bounds = array<i64: 1, 8, 32>}, {transform_indices = @transform_2, window_bounds = array<i64: 1, 4, 8, 8>}]} {
    %c0 = arith.constant 0 : index
    %c0_0 = arith.constant 0 : index
    %c0_1 = arith.constant 0 : index
    %0 = vector.load %arg1[%c0, %c0_0, %c0_1] : memref<1x8x96xbf16, #tpu.memory_space<vmem>>, vector<1x8x96xbf16>
    %1 = vector.shape_cast %0 : vector<1x8x96xbf16> to vector<8x96xbf16>
    %2 = vector.extract_strided_slice %1 {offsets = [0, 0], sizes = [8, 8], strides = [1, 1]} : vector<8x96xbf16> to vector<8x8xbf16>
    %3 = vector.extract_strided_slice %1 {offsets = [0, 32], sizes = [8, 8], strides = [1, 1]} : vector<8x96xbf16> to vector<8x8xbf16>
    %4 = vector.extract_strided_slice %1 {offsets = [0, 64], sizes = [8, 8], strides = [1, 1]} : vector<8x96xbf16> to vector<8x8xbf16>
    %5 = arith.extf %2 : vector<8x8xbf16> to vector<8x8xf32>
    %cst = arith.constant 0.353553385 : f32
    %6 = vector.broadcast %cst : f32 to vector<8x8xf32>
    %7 = arith.mulf %5, %6 : vector<8x8xf32>
    %8 = arith.truncf %7 : vector<8x8xf32> to vector<8x8xbf16>
    %cst_2 = arith.constant dense<0.000000e+00> : vector<8x8xf32>
    %9 = tpu.matmul %8, %3, %cst_2 {dimension_numbers = #tpu.dot_dimension_numbers<[1], [1], [0], [0], [0, 0, 1, 0], [], []>} : vector<8x8xbf16>, vector<8x8xbf16>, vector<8x8xf32> -> vector<8x8xf32>
    %cst_3 = arith.constant dense<0xFF800000> : vector<8xf32>
    %10 = vector.multi_reduction <maximumf>, %9, %cst_3 [1] : vector<8x8xf32> to vector<8xf32>
    %11 = vector.shape_cast %10 : vector<8xf32> to vector<8x1xf32>
    %12 = vector.broadcast %11 : vector<8x1xf32> to vector<8x8xf32>
    %13 = arith.subf %9, %12 : vector<8x8xf32>
    %14 = math.exp %13 : vector<8x8xf32>
    %cst_4 = arith.constant dense<0.000000e+00> : vector<8xf32>
    %15 = vector.multi_reduction <add>, %14, %cst_4 [1] : vector<8x8xf32> to vector<8xf32>
    %16 = vector.shape_cast %15 : vector<8xf32> to vector<8x1xf32>
    %17 = tpu.reciprocal %16 {approx = true} : vector<8x1xf32> -> vector<8x1xf32>
    %18 = vector.broadcast %17 : vector<8x1xf32> to vector<8x8xf32>
    %19 = arith.mulf %14, %18 : vector<8x8xf32>
    %c0_5 = arith.constant 0 : index
    %c0_6 = arith.constant 0 : index
    %c0_7 = arith.constant 0 : index
    %c0_8 = arith.constant 0 : index
    %20 = vector.load %arg3[%c0_5, %c0_6, %c0_7, %c0_8] : memref<1x4x8x8xf32, #tpu.memory_space<vmem>>, vector<1x1x8x8xf32>
    %21 = vector.shape_cast %20 : vector<1x1x8x8xf32> to vector<8x8xf32>
    %22 = vector.shape_cast %19 : vector<8x8xf32> to vector<1x1x8x8xf32>
    tpu.vector_store %arg3[%c0_5, %c0_6, %c0_7, %c0_8], %22 {strides = array<i32>} : memref<1x4x8x8xf32, #tpu.memory_space<vmem>>, vector<1x1x8x8xf32>,
    %23 = arith.truncf %19 : vector<8x8xf32> to vector<8x8xbf16>
    %cst_9 = arith.constant dense<0.000000e+00> : vector<8x8xf32>
    %24 = tpu.matmul %23, %4, %cst_9 {dimension_numbers = #tpu.dot_dimension_numbers<[1], [0], [0], [1], [0, 0, 1, 1], [], []>} : vector<8x8xbf16>, vector<8x8xbf16>, vector<8x8xf32> -> vector<8x8xf32>
    %25 = vector.extract_strided_slice %1 {offsets = [0, 8], sizes = [8, 8], strides = [1, 1]} : vector<8x96xbf16> to vector<8x8xbf16>
    %26 = vector.extract_strided_slice %1 {offsets = [0, 40], sizes = [8, 8], strides = [1, 1]} : vector<8x96xbf16> to vector<8x8xbf16>
    %27 = vector.extract_strided_slice %1 {offsets = [0, 72], sizes = [8, 8], strides = [1, 1]} : vector<8x96xbf16> to vector<8x8xbf16>
    %28 = arith.extf %25 : vector<8x8xbf16> to vector<8x8xf32>
    %cst_10 = arith.constant 0.353553385 : f32
    %29 = vector.broadcast %cst_10 : f32 to vector<8x8xf32>
    %30 = arith.mulf %28, %29 : vector<8x8xf32>
    %31 = arith.truncf %30 : vector<8x8xf32> to vector<8x8xbf16>
    %cst_11 = arith.constant dense<0.000000e+00> : vector<8x8xf32>
    %32 = tpu.matmul %31, %26, %cst_11 {dimension_numbers = #tpu.dot_dimension_numbers<[1], [1], [0], [0], [0, 0, 1, 0], [], []>} : vector<8x8xbf16>, vector<8x8xbf16>, vector<8x8xf32> -> vector<8x8xf32>
    %cst_12 = arith.constant dense<0xFF800000> : vector<8xf32>
    %33 = vector.multi_reduction <maximumf>, %32, %cst_12 [1] : vector<8x8xf32> to vector<8xf32>
    %34 = vector.shape_cast %33 : vector<8xf32> to vector<8x1xf32>
    %35 = vector.broadcast %34 : vector<8x1xf32> to vector<8x8xf32>
    %36 = arith.subf %32, %35 : vector<8x8xf32>
    %37 = math.exp %36 : vector<8x8xf32>
    %cst_13 = arith.constant dense<0.000000e+00> : vector<8xf32>
    %38 = vector.multi_reduction <add>, %37, %cst_13 [1] : vector<8x8xf32> to vector<8xf32>
    %39 = vector.shape_cast %38 : vector<8xf32> to vector<8x1xf32>
    %40 = tpu.reciprocal %39 {approx = true} : vector<8x1xf32> -> vector<8x1xf32>
    %41 = vector.broadcast %40 : vector<8x1xf32> to vector<8x8xf32>
    %42 = arith.mulf %37, %41 : vector<8x8xf32>
    %c0_14 = arith.constant 0 : index
    %c1 = arith.constant 1 : index
    %c0_15 = arith.constant 0 : index
    %c0_16 = arith.constant 0 : index
    %43 = vector.load %arg3[%c0_14, %c1, %c0_15, %c0_16] : memref<1x4x8x8xf32, #tpu.memory_space<vmem>>, vector<1x1x8x8xf32>
    %44 = vector.shape_cast %43 : vector<1x1x8x8xf32> to vector<8x8xf32>
    %45 = vector.shape_cast %42 : vector<8x8xf32> to vector<1x1x8x8xf32>
    tpu.vector_store %arg3[%c0_14, %c1, %c0_15, %c0_16], %45 {strides = array<i32>} : memref<1x4x8x8xf32, #tpu.memory_space<vmem>>, vector<1x1x8x8xf32>,
    %46 = arith.truncf %42 : vector<8x8xf32> to vector<8x8xbf16>
    %cst_17 = arith.constant dense<0.000000e+00> : vector<8x8xf32>
    %47 = tpu.matmul %46, %27, %cst_17 {dimension_numbers = #tpu.dot_dimension_numbers<[1], [0], [0], [1], [0, 0, 1, 1], [], []>} : vector<8x8xbf16>, vector<8x8xbf16>, vector<8x8xf32> -> vector<8x8xf32>
    %48 = vector.extract_strided_slice %1 {offsets = [0, 16], sizes = [8, 8], strides = [1, 1]} : vector<8x96xbf16> to vector<8x8xbf16>
    %49 = vector.extract_strided_slice %1 {offsets = [0, 48], sizes = [8, 8], strides = [1, 1]} : vector<8x96xbf16> to vector<8x8xbf16>
    %50 = vector.extract_strided_slice %1 {offsets = [0, 80], sizes = [8, 8], strides = [1, 1]} : vector<8x96xbf16> to vector<8x8xbf16>
    %51 = arith.extf %48 : vector<8x8xbf16> to vector<8x8xf32>
    %cst_18 = arith.constant 0.353553385 : f32
    %52 = vector.broadcast %cst_18 : f32 to vector<8x8xf32>
    %53 = arith.mulf %51, %52 : vector<8x8xf32>
    %54 = arith.truncf %53 : vector<8x8xf32> to vector<8x8xbf16>
    %cst_19 = arith.constant dense<0.000000e+00> : vector<8x8xf32>
    %55 = tpu.matmul %54, %49, %cst_19 {dimension_numbers = #tpu.dot_dimension_numbers<[1], [1], [0], [0], [0, 0, 1, 0], [], []>} : vector<8x8xbf16>, vector<8x8xbf16>, vector<8x8xf32> -> vector<8x8xf32>
    %cst_20 = arith.constant dense<0xFF800000> : vector<8xf32>
    %56 = vector.multi_reduction <maximumf>, %55, %cst_20 [1] : vector<8x8xf32> to vector<8xf32>
    %57 = vector.shape_cast %56 : vector<8xf32> to vector<8x1xf32>
    %58 = vector.broadcast %57 : vector<8x1xf32> to vector<8x8xf32>
    %59 = arith.subf %55, %58 : vector<8x8xf32>
    %60 = math.exp %59 : vector<8x8xf32>
    %cst_21 = arith.constant dense<0.000000e+00> : vector<8xf32>
    %61 = vector.multi_reduction <add>, %60, %cst_21 [1] : vector<8x8xf32> to vector<8xf32>
    %62 = vector.shape_cast %61 : vector<8xf32> to vector<8x1xf32>
    %63 = tpu.reciprocal %62 {approx = true} : vector<8x1xf32> -> vector<8x1xf32>
    %64 = vector.broadcast %63 : vector<8x1xf32> to vector<8x8xf32>
    %65 = arith.mulf %60, %64 : vector<8x8xf32>
    %c0_22 = arith.constant 0 : index
    %c2 = arith.constant 2 : index
    %c0_23 = arith.constant 0 : index
    %c0_24 = arith.constant 0 : index
    %66 = vector.load %arg3[%c0_22, %c2, %c0_23, %c0_24] : memref<1x4x8x8xf32, #tpu.memory_space<vmem>>, vector<1x1x8x8xf32>
    %67 = vector.shape_cast %66 : vector<1x1x8x8xf32> to vector<8x8xf32>
    %68 = vector.shape_cast %65 : vector<8x8xf32> to vector<1x1x8x8xf32>
    tpu.vector_store %arg3[%c0_22, %c2, %c0_23, %c0_24], %68 {strides = array<i32>} : memref<1x4x8x8xf32, #tpu.memory_space<vmem>>, vector<1x1x8x8xf32>,
    %69 = arith.truncf %65 : vector<8x8xf32> to vector<8x8xbf16>
    %cst_25 = arith.constant dense<0.000000e+00> : vector<8x8xf32>
    %70 = tpu.matmul %69, %50, %cst_25 {dimension_numbers = #tpu.dot_dimension_numbers<[1], [0], [0], [1], [0, 0, 1, 1], [], []>} : vector<8x8xbf16>, vector<8x8xbf16>, vector<8x8xf32> -> vector<8x8xf32>
    %71 = vector.extract_strided_slice %1 {offsets = [0, 24], sizes = [8, 8], strides = [1, 1]} : vector<8x96xbf16> to vector<8x8xbf16>
    %72 = vector.extract_strided_slice %1 {offsets = [0, 56], sizes = [8, 8], strides = [1, 1]} : vector<8x96xbf16> to vector<8x8xbf16>
    %73 = vector.extract_strided_slice %1 {offsets = [0, 88], sizes = [8, 8], strides = [1, 1]} : vector<8x96xbf16> to vector<8x8xbf16>
    %74 = arith.extf %71 : vector<8x8xbf16> to vector<8x8xf32>
    %cst_26 = arith.constant 0.353553385 : f32
    %75 = vector.broadcast %cst_26 : f32 to vector<8x8xf32>
    %76 = arith.mulf %74, %75 : vector<8x8xf32>
    %77 = arith.truncf %76 : vector<8x8xf32> to vector<8x8xbf16>
    %cst_27 = arith.constant dense<0.000000e+00> : vector<8x8xf32>
    %78 = tpu.matmul %77, %72, %cst_27 {dimension_numbers = #tpu.dot_dimension_numbers<[1], [1], [0], [0], [0, 0, 1, 0], [], []>} : vector<8x8xbf16>, vector<8x8xbf16>, vector<8x8xf32> -> vector<8x8xf32>
    %cst_28 = arith.constant dense<0xFF800000> : vector<8xf32>
    %79 = vector.multi_reduction <maximumf>, %78, %cst_28 [1] : vector<8x8xf32> to vector<8xf32>
    %80 = vector.shape_cast %79 : vector<8xf32> to vector<8x1xf32>
    %81 = vector.broadcast %80 : vector<8x1xf32> to vector<8x8xf32>
    %82 = arith.subf %78, %81 : vector<8x8xf32>
    %83 = math.exp %82 : vector<8x8xf32>
    %cst_29 = arith.constant dense<0.000000e+00> : vector<8xf32>
    %84 = vector.multi_reduction <add>, %83, %cst_29 [1] : vector<8x8xf32> to vector<8xf32>
    %85 = vector.shape_cast %84 : vector<8xf32> to vector<8x1xf32>
    %86 = tpu.reciprocal %85 {approx = true} : vector<8x1xf32> -> vector<8x1xf32>
    %87 = vector.broadcast %86 : vector<8x1xf32> to vector<8x8xf32>
    %88 = arith.mulf %83, %87 : vector<8x8xf32>
    %c0_30 = arith.constant 0 : index
    %c3 = arith.constant 3 : index
    %c0_31 = arith.constant 0 : index
    %c0_32 = arith.constant 0 : index
    %89 = vector.load %arg3[%c0_30, %c3, %c0_31, %c0_32] : memref<1x4x8x8xf32, #tpu.memory_space<vmem>>, vector<1x1x8x8xf32>
    %90 = vector.shape_cast %89 : vector<1x1x8x8xf32> to vector<8x8xf32>
    %91 = vector.shape_cast %88 : vector<8x8xf32> to vector<1x1x8x8xf32>
    tpu.vector_store %arg3[%c0_30, %c3, %c0_31, %c0_32], %91 {strides = array<i32>} : memref<1x4x8x8xf32, #tpu.memory_space<vmem>>, vector<1x1x8x8xf32>,
    %92 = arith.truncf %88 : vector<8x8xf32> to vector<8x8xbf16>
    %cst_33 = arith.constant dense<0.000000e+00> : vector<8x8xf32>
    %93 = tpu.matmul %92, %73, %cst_33 {dimension_numbers = #tpu.dot_dimension_numbers<[1], [0], [0], [1], [0, 0, 1, 1], [], []>} : vector<8x8xbf16>, vector<8x8xbf16>, vector<8x8xf32> -> vector<8x8xf32>
    %94 = tpu.concatenate %24, %47, %70, %93 in 1 : vector<8x8xf32>, vector<8x8xf32>, vector<8x8xf32>, vector<8x8xf32> -> vector<8x32xf32>
    %95 = arith.truncf %94 : vector<8x32xf32> to vector<8x32xbf16>
    %c0_34 = arith.constant 0 : index
    %c0_35 = arith.constant 0 : index
    %c0_36 = arith.constant 0 : index
    %96 = vector.load %arg2[%c0_34, %c0_35, %c0_36] : memref<1x8x32xbf16, #tpu.memory_space<vmem>>, vector<1x8x32xbf16>
    %97 = vector.shape_cast %96 : vector<1x8x32xbf16> to vector<8x32xbf16>
    %98 = vector.shape_cast %95 : vector<8x32xbf16> to vector<1x8x32xbf16>
    tpu.vector_store %arg2[%c0_34, %c0_35, %c0_36], %98 {strides = array<i32>} : memref<1x8x32xbf16, #tpu.memory_space<vmem>>, vector<1x8x32xbf16>,
    return
  }
  func.func @transform_0(%arg0: i32) -> (i32, i32, i32) {
    %c0_i32 = arith.constant 0 : i32
    %c0_i32_0 = arith.constant 0 : i32
    %c0_i32_1 = arith.constant 0 : i32
    return %arg0, %c0_i32, %c0_i32_0 : i32, i32, i32
  }
  func.func @transform_1(%arg0: i32) -> (i32, i32, i32) {
    %c0_i32 = arith.constant 0 : i32
    %c0_i32_0 = arith.constant 0 : i32
    %c0_i32_1 = arith.constant 0 : i32
    return %arg0, %c0_i32, %c0_i32_0 : i32, i32, i32
  }
  func.func @transform_2(%arg0: i32) -> (i32, i32, i32, i32) {
    %c0_i32 = arith.constant 0 : i32
    %c0_i32_0 = arith.constant 0 : i32
    %c0_i32_1 = arith.constant 0 : i32
    %c0_i32_2 = arith.constant 0 : i32
    return %arg0, %c0_i32, %c0_i32_0, %c0_i32_1 : i32, i32, i32, i32
  }
}

</mosaic_0001>

<llo_original>
// kernel: attention_forward.3
$region0: #{attention_forward.3}
  #allocation0 [shape = 'u32[]', space=smem, size = 0x4, offset = 0x4, fixed_abs, tag = 'smem constant byte address 0x4 - core index']
  #allocation1 [shape = 'u32[144,128]{1,0:T(1,128)}', space=vmem, size = 0x12000, scoped, tag = 'internal scratch']
  #allocation2 [shape = 'f32[16,96]{1,0:T(8,128)}', space=vmem, size = 0x2000, scoped, tag = 'scratch operand']
  %s0 = inlined_call_operand.hbm [shape: f32[16,32], index: 0, kind: input, shape index: {}]
  %s1 = inlined_call_operand.hbm [shape: f32[32,96], index: 1, kind: input, shape index: {}]
  %s2 = inlined_call_operand.vmem [shape: bf16[16,96], index: 2, kind: output, shape index: {}]
  %s3 = sld [smem:[#allocation0]]
  $region34: #{attention_forward.3} parent=0
    _
  %s5 = ssub.s32 1, %s3
  %s6 = scalar_select 0, %s5, %s3
  $region1: #{attention_forward.3} parent=0
    #allocation3 [shape = 'u8[8192]{0}', space=vmem, size = 0x2000, scoped, tag = 'input window, operand 0, single buffered']
    #allocation4 [shape = 's32[1]{0}', space=sflag, size = 0x4, scoped, tag = 'scoped memory for attention_forward.3']
    #allocation5 [shape = 'u8[16384]{0}', space=vmem, size = 0x4000, scoped, tag = 'input window, operand 1, single buffered']
    #allocation6 [shape = 's32[1]{0}', space=sflag, size = 0x4, scoped, tag = 'scoped memory for attention_forward.3']
    %7 = vsyncpa [#allocation4], 0
    %8 = vsyncpa [#allocation6], 0
    // Predicated region
    $region2: #{attention_forward.3} parent=1 // pred_check
      _
    $region3: #{attention_forward.3} parent=1 // pred_check_branch
      %10 = sbr.rel (0) target = $region5
    $region4: #{attention_forward.3} parent=1 // pred_region
      %s12 = ssub.s32 256, 256
      %13 = vsyncadd [#allocation4], %s12
      %s14 = sshll.u32 [#allocation3], 4
      %s15 = int_to_ptr.vmem [resolvable:$true] %s14
      %20 = dma.hbm_to_vmem [thread:$0]  %s0, 256, %s15, [#allocation4], 128, 128, 8
    $region5: #{attention_forward.3} parent=1 // pred_fallthru
      _
    // Predicated region
    $region6: #{attention_forward.3} parent=1 // pred_check
      _
    $region7: #{attention_forward.3} parent=1 // pred_check_branch
      %22 = sbr.rel (0) target = $region9
    $region8: #{attention_forward.3} parent=1 // pred_region
      %s24 = ssub.s32 512, 512
      %25 = vsyncadd [#allocation6], %s24
      %s26 = sshll.u32 [#allocation5], 4
      %s27 = int_to_ptr.vmem [resolvable:$true] %s26
      %32 = dma.hbm_to_vmem [thread:$0]  %s1, 512, %s27, [#allocation6], 128, 128, 8
    $region9: #{attention_forward.3} parent=1 // pred_fallthru
      _
    // Predicated region
    $region10: #{attention_forward.3} parent=1 // pred_check
      _
    $region11: #{attention_forward.3} parent=1 // pred_check_branch
      %34 = sbr.rel (0) target = $region13
    $region12: #{attention_forward.3} parent=1 // pred_region
      %35 = dma.done [#allocation4], 256
    $region13: #{attention_forward.3} parent=1 // pred_fallthru
      _
    // Predicated region
    $region14: #{attention_forward.3} parent=1 // pred_check
      _
    $region15: #{attention_forward.3} parent=1 // pred_check_branch
      %37 = sbr.rel (0) target = $region17
    $region16: #{attention_forward.3} parent=1 // pred_region
      %38 = dma.done [#allocation6], 512
    $region17: #{attention_forward.3} parent=1 // pred_fallthru
      _
    %p40 = scmp.eq.s32.totalorder 0, 0
    // Predicated region
    $region18: #{attention_forward.3} parent=1 // pred_check
      %p41 = pneg %p40
    $region19: #{attention_forward.3} parent=1 // pred_check_branch
      %43 = sbr.rel (%p41) target = $region21
    $region20: #{attention_forward.3} parent=1 // pred_region
      %vm44 = vcmask 785408
      %45 = vst.msk [vmem:[#allocation2] sm:$0xff] %vm44, 0.0
      %46 = vst.msk [vmem:[#allocation2 + $0x8] sm:$0xff] %vm44, 0.0
    $region21: #{attention_forward.3} parent=1 // pred_fallthru
      _
    %v47 = vld [vmem:[#allocation2] sm:$0xff]
    %v48 = vld [vmem:[#allocation2 + $0x8] sm:$0xff]
    %v49 = vld [vmem:[#allocation3] sm:$0xff]
    %v50 = vld [vmem:[#allocation3 + $0x8] sm:$0xff]
    %v51 = vpack.c.bf16 %v50, %v49
    %v52 = vld [vmem:[#allocation5] sm:$0xff]
    %v53 = vld [vmem:[#allocation5 + $0x8] sm:$0xff]
    %v54 = vld [vmem:[#allocation5 + $0x10] sm:$0xff]
    %v55 = vld [vmem:[#allocation5 + $0x18] sm:$0xff]
    %v56 = vpack.c.bf16 %v53, %v52
    %v57 = vpack.c.bf16 %v55, %v54
    %vm58 = vcmask 261120
    %v60 = vsel %vm58, %v51, 0
    %62 = vmatprep.subr.bf16.mxu0 0
    %63 = vmatpush1.bf16.msra.mxu0 %v56
    %64 = vmatprep.subr.bf16.mxu0 0
    %65 = vmatpush1.bf16.msra.mxu0 %v57
    %66 = vmatprep.subr.bf16.mxu0 0
    %67 = vmatpush1.bf16.msra.mxu0 0
    %68 = vmatprep.subr.bf16.mxu0 0
    %69 = vmatpush1.bf16.msra.mxu0 0
    %70 = vmatprep.subr.bf16.mxu0 0
    %71 = vmatpush1.bf16.msra.mxu0 0
    %72 = vmatprep.subr.bf16.mxu0 0
    %73 = vmatpush1.bf16.msra.mxu0 0
    %74 = vmatprep.subr.bf16.mxu0 0
    %75 = vmatpush1.bf16.msra.mxu0 0
    %76 = vmatprep.subr.bf16.mxu0 0
    %77 = vmatpush1.bf16.msra.mxu0 0
    %78 = vmatprep.subr.bf16.mxu0 0
    %79 = vmatpush1.bf16.msra.mxu0 0
    %80 = vmatprep.subr.bf16.mxu0 0
    %81 = vmatpush1.bf16.msra.mxu0 0
    %82 = vmatprep.subr.bf16.mxu0 0
    %83 = vmatpush1.bf16.msra.mxu0 0
    %84 = vmatprep.subr.bf16.mxu0 0
    %85 = vmatpush1.bf16.msra.mxu0 0
    %86 = vmatprep.subr.bf16.mxu0 0
    %87 = vmatpush1.bf16.msra.mxu0 0
    %88 = vmatprep.subr.bf16.mxu0 0
    %89 = vmatpush1.bf16.msra.mxu0 0
    %90 = vmatprep.subr.bf16.mxu0 0
    %91 = vmatpush1.bf16.msra.mxu0 0
    %92 = vmatprep.subr.bf16.mxu0 0
    %93 = vmatpush1.bf16.msra.mxu0 0
    %94 = vmatprep.mubr.bf16.mxu0 0
    %95 = vmatmul.mubr.bf16.gmra.mrb[0].mxu0 %v60
    %v96 = vpop.f32.mrb[0].mxu0
    %v97 = vadd.f32 0.0, %v96
    %v98 = vpop.f32.mrb[0].mxu0
    %v99 = vpop.f32.mrb[0].mxu0
    %v100 = vadd.f32 0.0, %v99
    %v101 = vpop.f32.mrb[0].mxu0
    %102 = vdwg.mxu0
    %v103 = vadd.f32 %v47, %v97
    %v104 = vadd.f32 %v48, %v100
    %vm105 = vcmask 785408
    %106 = vst.msk [vmem:[#allocation2] sm:$0xff] %vm105, %v103
    %107 = vst.msk [vmem:[#allocation2 + $0x8] sm:$0xff] %vm105, %v104
    // Predicated region
    $region22: #{attention_forward.3} parent=1 // pred_check
      %p108 = pneg %p40
    $region23: #{attention_forward.3} parent=1 // pred_check_branch
      %110 = sbr.rel (%p108) target = $region25
    $region24: #{attention_forward.3} parent=1 // pred_region
      %v111 = vld [vmem:[#allocation2] sm:$0xff]
      %v112 = vld [vmem:[#allocation2 + $0x8] sm:$0xff]
      %v113 = vpack.c.bf16 %v112, %v111
      %v115 = vunpack.c.l.b16 %v113
      %v116 = vunpack.c.h.b16 %v113
      %v117 = vpack.c.b16 %v115, %v115
      %v118 = vpack.c.b16 %v116, %v116
      %vm121 = vcmask 781312
      %122 = vst.msk [vmem:[%s2] sm:$0xf] %vm121, %v117
      %123 = vst.msk [vmem:[%s2 + $0x4] sm:$0xf] %vm121, %v118
    $region25: #{attention_forward.3} parent=1 // pred_fallthru
      _
    // Predicated region
    $region26: #{attention_forward.3} parent=1 // pred_check
      _
    $region27: #{attention_forward.3} parent=1 // pred_check_branch
      %125 = sbr.rel (0) target = $region29
    $region28: #{attention_forward.3} parent=1 // pred_region
      _
    $region29: #{attention_forward.3} parent=1 // pred_fallthru
      _
    // Predicated region
    $region30: #{attention_forward.3} parent=1 // pred_check
      _
    $region31: #{attention_forward.3} parent=1 // pred_check_branch
      %127 = sbr.rel (0) target = $region33
    $region32: #{attention_forward.3} parent=1 // pred_region
      _
    $region33: #{attention_forward.3} parent=1 // pred_fallthru
      _
    %128 = vsyncpa [#allocation4], 1
    %129 = vsyncpa [#allocation6], 1

// kernel: attention_forward.5
$region0: #{attention_forward.5}
  #allocation0 [shape = 'u32[]', space=smem, size = 0x4, offset = 0x4, fixed_abs, tag = 'smem constant byte address 0x4 - core index']
  #allocation1 [shape = 'u32[144,128]{1,0:T(1,128)}', space=vmem, size = 0x12000, scoped, tag = 'internal scratch']
  #allocation2 [shape = 'f32[16,32]{1,0:T(8,128)}', space=vmem, size = 0x2000, scoped, tag = 'scratch operand']
  %s0 = inlined_call_operand.vmem [shape: bf16[16,32], index: 0, kind: input, shape index: {}]
  %s1 = inlined_call_operand.vmem [shape: f32[32,32], index: 1, kind: input, shape index: {}]
  %s2 = inlined_call_operand.vmem [shape: f32[1,32], index: 2, kind: input, shape index: {}]
  %s3 = inlined_call_operand.hbm [shape: f32[16,32], index: 3, kind: output, shape index: {}]
  %s4 = sld [smem:[#allocation0]]
  $region30: #{attention_forward.5} parent=0
    _
  %s6 = ssub.s32 1, %s4
  %s7 = scalar_select 0, %s6, %s4
  $region1: #{attention_forward.5} parent=0
    #allocation3 [shape = 'u8[8192]{0}', space=vmem, size = 0x2000, scoped, tag = 'output window, operand 0, single buffered']
    #allocation4 [shape = 's32[1]{0}', space=sflag, size = 0x4, scoped, tag = 'scoped memory for attention_forward.5']
    %8 = vsyncpa [#allocation4], 0
    // Predicated region
    $region2: #{attention_forward.5} parent=1 // pred_check
      _
    $region3: #{attention_forward.5} parent=1 // pred_check_branch
      %10 = sbr.rel (0) target = $region5
    $region4: #{attention_forward.5} parent=1 // pred_region
      _
    $region5: #{attention_forward.5} parent=1 // pred_fallthru
      _
    // Predicated region
    $region6: #{attention_forward.5} parent=1 // pred_check
      _
    $region7: #{attention_forward.5} parent=1 // pred_check_branch
      %12 = sbr.rel (0) target = $region9
    $region8: #{attention_forward.5} parent=1 // pred_region
      _
    $region9: #{attention_forward.5} parent=1 // pred_fallthru
      _
    // Predicated region
    $region10: #{attention_forward.5} parent=1 // pred_check
      _
    $region11: #{attention_forward.5} parent=1 // pred_check_branch
      %14 = sbr.rel (0) target = $region13
    $region12: #{attention_forward.5} parent=1 // pred_region
      _
    $region13: #{attention_forward.5} parent=1 // pred_fallthru
      _
    %p16 = scmp.eq.s32.totalorder 0, 0
    // Predicated region
    $region14: #{attention_forward.5} parent=1 // pred_check
      %p17 = pneg %p16
    $region15: #{attention_forward.5} parent=1 // pred_check_branch
      %19 = sbr.rel (%p17) target = $region17
    $region16: #{attention_forward.5} parent=1 // pred_region
      %vm20 = vcmask 261120
      %21 = vst.msk [vmem:[#allocation2] sm:$0xff] %vm20, 0.0
      %22 = vst.msk [vmem:[#allocation2 + $0x8] sm:$0xff] %vm20, 0.0
    $region17: #{attention_forward.5} parent=1 // pred_fallthru
      _
    %v23 = vld [vmem:[#allocation2] sm:$0xff]
    %v24 = vld [vmem:[#allocation2 + $0x8] sm:$0xff]
    %v25 = vld [vmem:[%s0] sm:$0xf]
    %v26 = vld [vmem:[%s0 + $0x4] sm:$0xf]
    %v27 = vld [vmem:[%s1] sm:$0xff]
    %v28 = vld [vmem:[%s1 + $0x8] sm:$0xff]
    %v29 = vld [vmem:[%s1 + $0x10] sm:$0xff]
    %v30 = vld [vmem:[%s1 + $0x18] sm:$0xff]
    %v31 = vpack.c.bf16 %v28, %v27
    %v32 = vpack.c.bf16 %v30, %v29
    %v35 = vunpack.c.l.b16 %v25
    %v36 = vunpack.c.l.b16 %v26
    %v37 = vpack.c.b16 %v36, %v35
    %vm38 = vcmask 261120
    %v40 = vsel %vm38, %v37, 0
    %42 = vmatprep.subr.bf16.mxu0 0
    %43 = vmatpush1.bf16.msra.mxu0 %v31
    %44 = vmatprep.subr.bf16.mxu0 0
    %45 = vmatpush1.bf16.msra.mxu0 %v32
    %46 = vmatprep.subr.bf16.mxu0 0
    %47 = vmatpush1.bf16.msra.mxu0 0
    %48 = vmatprep.subr.bf16.mxu0 0
    %49 = vmatpush1.bf16.msra.mxu0 0
    %50 = vmatprep.subr.bf16.mxu0 0
    %51 = vmatpush1.bf16.msra.mxu0 0
    %52 = vmatprep.subr.bf16.mxu0 0
    %53 = vmatpush1.bf16.msra.mxu0 0
    %54 = vmatprep.subr.bf16.mxu0 0
    %55 = vmatpush1.bf16.msra.mxu0 0
    %56 = vmatprep.subr.bf16.mxu0 0
    %57 = vmatpush1.bf16.msra.mxu0 0
    %58 = vmatprep.subr.bf16.mxu0 0
    %59 = vmatpush1.bf16.msra.mxu0 0
    %60 = vmatprep.subr.bf16.mxu0 0
    %61 = vmatpush1.bf16.msra.mxu0 0
    %62 = vmatprep.subr.bf16.mxu0 0
    %63 = vmatpush1.bf16.msra.mxu0 0
    %64 = vmatprep.subr.bf16.mxu0 0
    %65 = vmatpush1.bf16.msra.mxu0 0
    %66 = vmatprep.subr.bf16.mxu0 0
    %67 = vmatpush1.bf16.msra.mxu0 0
    %68 = vmatprep.subr.bf16.mxu0 0
    %69 = vmatpush1.bf16.msra.mxu0 0
    %70 = vmatprep.subr.bf16.mxu0 0
    %71 = vmatpush1.bf16.msra.mxu0 0
    %72 = vmatprep.subr.bf16.mxu0 0
    %73 = vmatpush1.bf16.msra.mxu0 0
    %74 = vmatprep.mubr.bf16.mxu0 0
    %75 = vmatmul.mubr.bf16.gmra.mrb[0].mxu0 %v40
    %v76 = vpop.f32.mrb[0].mxu0
    %v77 = vadd.f32 0.0, %v76
    %v78 = vpop.f32.mrb[0].mxu0
    %v79 = vpop.f32.mrb[0].mxu0
    %v80 = vadd.f32 0.0, %v79
    %v81 = vpop.f32.mrb[0].mxu0
    %82 = vdwg.mxu0
    %v83 = vadd.f32 %v23, %v77
    %v84 = vadd.f32 %v24, %v80
    %85 = vst.msk [vmem:[#allocation2] sm:$0xff] %vm38, %v83
    %86 = vst.msk [vmem:[#allocation2 + $0x8] sm:$0xff] %vm38, %v84
    // Predicated region
    $region18: #{attention_forward.5} parent=1 // pred_check
      %p87 = pneg %p16
    $region19: #{attention_forward.5} parent=1 // pred_check_branch
      %89 = sbr.rel (%p87) target = $region21
    $region20: #{attention_forward.5} parent=1 // pred_region
      %v90 = vld [vmem:[#allocation2] sm:$0xff]
      %v91 = vld [vmem:[#allocation2 + $0x8] sm:$0xff]
      %v92 = vld [vmem:[%s2] sm:$0x1]
      %v94 = vlaneseq
      %v95 = vshrl.u32 %v94, 7
      %v96 = vsub.s32 0, %v95
      %v97 = vrot.slane %v92, %v96
      %v99 = vadd.f32 %v90, %v97
      %v100 = vadd.f32 %v91, %v97
      %101 = vst.msk [vmem:[#allocation3] sm:$0xff] %vm38, %v99
      %102 = vst.msk [vmem:[#allocation3 + $0x8] sm:$0xff] %vm38, %v100
    $region21: #{attention_forward.5} parent=1 // pred_fallthru
      _
    // Predicated region
    $region22: #{attention_forward.5} parent=1 // pred_check
      _
    $region23: #{attention_forward.5} parent=1 // pred_check_branch
      %104 = sbr.rel (0) target = $region25
    $region24: #{attention_forward.5} parent=1 // pred_region
      %s106 = ssub.s32 256, 256
      %107 = vsyncadd [#allocation4], %s106
      %s108 = sshll.u32 [#allocation3], 4
      %s109 = int_to_ptr.vmem [resolvable:$true] %s108
      %114 = dma.vmem_to_hbm [thread:$0]  %s109, 256, %s3, [#allocation4], 128, 128, 8
    $region25: #{attention_forward.5} parent=1 // pred_fallthru
      _
    // Predicated region
    $region26: #{attention_forward.5} parent=1 // pred_check
      _
    $region27: #{attention_forward.5} parent=1 // pred_check_branch
      %116 = sbr.rel (0) target = $region29
    $region28: #{attention_forward.5} parent=1 // pred_region
      %117 = dma.done [#allocation4], 256
    $region29: #{attention_forward.5} parent=1 // pred_fallthru
      _
    %118 = vsyncpa [#allocation4], 1

// kernel: attention_forward.4
$region0: #{attention_forward.4}
  #allocation0 [shape = 'u32[]', space=smem, size = 0x4, offset = 0x4, fixed_abs, tag = 'smem constant byte address 0x4 - core index']
  #allocation1 [shape = 'u32[144,128]{1,0:T(1,128)}', space=vmem, size = 0x12000, scoped, tag = 'internal scratch']
  %s0 = inlined_call_operand.vmem [shape: bf16[2,8,96], index: 0, kind: input, shape index: {}]
  %s1 = inlined_call_operand.vmem [shape: bf16[2,8,32], index: 1, kind: output, shape index: {0}]
  %s2 = inlined_call_operand.hbm [shape: f32[2,4,8,8], index: 2, kind: output, shape index: {1}]
  %3 = xla_tuple %s1, %s2
  %s4 = sld [smem:[#allocation0]]
  $region45: #{attention_forward.4} parent=0
    _
  %s6 = ssub.s32 1, %s4
  %s7 = scalar_select 0, %s6, %s4
  $region1: #{attention_forward.4} parent=0
    #allocation2 [shape = 'u8[32768]{0}', space=vmem, size = 0x8000, scoped, tag = 'output window, operand 1']
    #allocation3 [shape = 's32[2]{0}', space=sflag, size = 0x8, scoped, tag = 'scoped memory for attention_forward.4']
    %8 = vsyncpa [#allocation3], 0
    %s9 = scalar_lea.sflag [#allocation3], 1
    %10 = vsyncpa %s9, 0
    loop: start=0, step=1, limit=4
    $region2: #{attention_forward.4} parent=1 // loop_pre_header
      _
    $region3: #{attention_forward.4} parent=1 // loop_header
      %s12 = sphi 0, %s16
      %p13 = scmp.ge.s32.totalorder %s12, 4
      %s22 = sphi 0, %s24
      %s25 = sphi 0, %s22
      %s26 = sphi 0, %s25
      %s42 = sphi 0, %s26
      %s48 = sphi 0, %s50
      %s51 = sphi 0, %s48
      %s52 = sphi 0, %s51
      %s68 = sphi 0, %s52
      %s74 = sphi 0, %s76
      %s77 = sphi 0, %s74
      %s78 = sphi 0, %s77
      %s94 = sphi 0, %s78
    $region4: #{attention_forward.4} parent=1 // loop_header_branch
      %15 = sbr.rel (%p13) target = $region8
    $region5: #{attention_forward.4} parent=1 // loop_body
      %s17 = ssub.s32 %s12, 1
      %s18 = ssub.s32 %s12, 2
      %s19 = sadd.s32 %s12, 1
      %s20 = ssub.s32 %s12, %s19
      %p21 = scmp.eq.s32.totalorder %s20, 0
      %s23 = sadd.s32 %s22, 1
      %s24 = scalar_select %p21, %s22, %s23
      %p27 = pneg %p21
      %p28 = scmp.eq.s32.totalorder %s12, 1
      %p29 = por %p27, %p28
      %p30 = scmp.ne.s32.totalorder %s22, %s25
      %p31 = scmp.eq.s32.totalorder %s12, 0
      %p32 = por %p30, %p31
      %p33 = scmp.ne.s32.totalorder %s22, %s25
      %p34 = scmp.eq.s32.totalorder %s17, 1
      %p35 = por %p33, %p34
      %p36 = scmp.ne.s32.totalorder %s25, %s26
      %p37 = scmp.eq.s32.totalorder %s17, 0
      %p38 = por %p36, %p37
      %p39 = scmp.ne.s32.totalorder %s25, %s26
      %p40 = scmp.eq.s32.totalorder %s18, 1
      %p41 = por %p39, %p40
      %p43 = scmp.ne.s32.totalorder %s26, %s42
      %p44 = scmp.eq.s32.totalorder %s18, 0
      %p45 = por %p43, %p44
      %s46 = ssub.s32 %s12, %s19
      %p47 = scmp.eq.s32.totalorder %s46, 0
      %s49 = sadd.s32 %s48, 1
      %s50 = scalar_select %p47, %s48, %s49
      %p53 = pneg %p47
      %p54 = scmp.eq.s32.totalorder %s12, 1
      %p55 = por %p53, %p54
      %p56 = scmp.ne.s32.totalorder %s48, %s51
      %p57 = scmp.eq.s32.totalorder %s12, 0
      %p58 = por %p56, %p57
      %p59 = scmp.ne.s32.totalorder %s48, %s51
      %p60 = scmp.eq.s32.totalorder %s17, 1
      %p61 = por %p59, %p60
      %p62 = scmp.ne.s32.totalorder %s51, %s52
      %p63 = scmp.eq.s32.totalorder %s17, 0
      %p64 = por %p62, %p63
      %p65 = scmp.ne.s32.totalorder %s51, %s52
      %p66 = scmp.eq.s32.totalorder %s18, 1
      %p67 = por %p65, %p66
      %p69 = scmp.ne.s32.totalorder %s52, %s68
      %p70 = scmp.eq.s32.totalorder %s18, 0
      %p71 = por %p69, %p70
      %s72 = ssub.s32 %s12, %s19
      %p73 = scmp.eq.s32.totalorder %s72, 0
      %s75 = sadd.s32 %s74, 1
      %s76 = scalar_select %p73, %s74, %s75
      %p79 = pneg %p73
      %p80 = scmp.eq.s32.totalorder %s12, 1
      %p81 = por %p79, %p80
      %p82 = scmp.ne.s32.totalorder %s74, %s77
      %p83 = scmp.eq.s32.totalorder %s12, 0
      %p84 = por %p82, %p83
      %p85 = scmp.ne.s32.totalorder %s74, %s77
      %p86 = scmp.eq.s32.totalorder %s17, 1
      %p87 = por %p85, %p86
      %p88 = scmp.ne.s32.totalorder %s77, %s78
      %p89 = scmp.eq.s32.totalorder %s17, 0
      %p90 = por %p88, %p89
      %p91 = scmp.ne.s32.totalorder %s77, %s78
      %p92 = scmp.eq.s32.totalorder %s18, 1
      %p93 = por %p91, %p92
      %p95 = scmp.ne.s32.totalorder %s78, %s94
      %p96 = scmp.eq.s32.totalorder %s18, 0
      %p97 = por %p95, %p96
      %p98 = scmp.le.s32.totalorder 1, %s12
      %p99 = scmp.lt.s32.totalorder %s12, 3
      %p100 = pnand %p98, %p99
      %p101 = pneg %p100
      // Predicated region
      $region9: #{attention_forward.4} parent=5 // pred_check
        _
      $region10: #{attention_forward.4} parent=5 // pred_check_branch
        %103 = sbr.rel (%p100) target = $region12
      $region11: #{attention_forward.4} parent=5 // pred_region
        %s104 = ssub.s32 %s12, 1
      $region12: #{attention_forward.4} parent=5 // pred_fallthru
        _
      %p105 = scmp.lt.s32.totalorder %s12, 2
      // Predicated region
      $region13: #{attention_forward.4} parent=5 // pred_check
        %p106 = pneg %p105
      $region14: #{attention_forward.4} parent=5 // pred_check_branch
        %108 = sbr.rel (%p106) target = $region16
      $region15: #{attention_forward.4} parent=5 // pred_region
        // Predicated region
        $region17: #{attention_forward.4} parent=15 // pred_check
          %p109 = pneg %p32
        $region18: #{attention_forward.4} parent=15 // pred_check_branch
          %111 = sbr.rel (%p109) target = $region20
        $region19: #{attention_forward.4} parent=15 // pred_region
          %p112 = scmp.lt.s32.totalorder %s12, 1
          %s113 = scalar_select %p112, %s12, 1
          %s114 = smul.addr %s113, 4
          %s115 = scalar_lea.vmem %s0, %s114
        $region20: #{attention_forward.4} parent=15 // pred_fallthru
          _
      $region16: #{attention_forward.4} parent=5 // pred_fallthru
        _
      %p116 = scmp.le.s32.totalorder 1, %s12
      %p117 = scmp.lt.s32.totalorder %s12, 3
      %p118 = pnand %p116, %p117
      %p119 = pneg %p118
      // Predicated region
      $region21: #{attention_forward.4} parent=5 // pred_check
        _
      $region22: #{attention_forward.4} parent=5 // pred_check_branch
        %121 = sbr.rel (%p118) target = $region24
      $region23: #{attention_forward.4} parent=5 // pred_region
        %s122 = ssub.s32 %s12, 1
        %p123 = scmp.lt.s32.totalorder %s17, 1
        %s124 = scalar_select %p123, %s17, 1
        %s125 = smul.addr %s124, 4
        %s126 = scalar_lea.vmem %s0, %s125
        %p127 = pneg %p38
        %p128 = pneg %p35
        %p129 = pneg %p64
        %p130 = pneg %p61
        %p131 = scmp.lt.s32.totalorder %s17, 1
        %s132 = scalar_select %p131, %s17, 1
        %s133 = smul.addr %s132, 4
        %s134 = scalar_lea.vmem %s1, %s133
        %p135 = pneg %p90
        %p136 = pneg %p87
        %s137 = sand.u32 %s77, 1
        %s138 = scalar_lea.sflag [#allocation3], %s137
        %s139 = sand.u32 %s77, 1
        %s140 = smul.addr %s139, 32
        %s141 = scalar_lea.vmem [#allocation2], %s140
        %p142 = scmp.lt.s32.totalorder %s17, 1
        %s143 = scalar_select %p142, %s17, 1
        %s144 = smul.addr %s143, 4
        %s145 = scalar_lea.vmem %s0, %s144
        %p146 = scmp.lt.s32.totalorder %s17, 1
        %s147 = scalar_select %p146, %s17, 1
        %s148 = smul.addr %s147, 4
        %s149 = scalar_lea.vmem %s1, %s148
        %v151 = vld [vmem:[%s145] sm:$0xf]
        %v152 = vunpack.c.l.bf16 %v151
        %v153 = vmul.f32 %v152, 0.35355338
        %v154 = vpack.c.bf16 %v153, %v153
        %v156 = vunpack.c.l.b16 %v151
        %v157 = vpack.c.b16 %v156, %v156
        %158 = vrot.lane.b32.xlu0 %v157, 96
        %v159 = vpop.permute.xlu0 %158
        %vm160 = vcmask 64512
        %v162 = vsel %vm160, %v154, 0
        %v165 = vsel %vm160, %v159, 0
        %167 = vmatprep.subr.bf16.mxu0 0
        %168 = vmatpush1.bf16.xpose.msra.mxu0 %v165
        %169 = vmatprep.subr.bf16.mxu0 0
        %170 = vmatpush1.bf16.xpose.msra.mxu0 0
        %171 = vmatprep.subr.bf16.mxu0 0
        %172 = vmatpush1.bf16.xpose.msra.mxu0 0
        %173 = vmatprep.subr.bf16.mxu0 0
        %174 = vmatpush1.bf16.xpose.msra.mxu0 0
        %175 = vmatprep.subr.bf16.mxu0 0
        %176 = vmatpush1.bf16.xpose.msra.mxu0 0
        %177 = vmatprep.subr.bf16.mxu0 0
        %178 = vmatpush1.bf16.xpose.msra.mxu0 0
        %179 = vmatprep.subr.bf16.mxu0 0
        %180 = vmatpush1.bf16.xpose.msra.mxu0 0
        %181 = vmatprep.subr.bf16.mxu0 0
        %182 = vmatpush1.bf16.xpose.msra.mxu0 0
        %183 = vmatprep.subr.bf16.mxu0 0
        %184 = vmatpush1.bf16.xpose.msra.mxu0 0
        %185 = vmatprep.subr.bf16.mxu0 0
        %186 = vmatpush1.bf16.xpose.msra.mxu0 0
        %187 = vmatprep.subr.bf16.mxu0 0
        %188 = vmatpush1.bf16.xpose.msra.mxu0 0
        %189 = vmatprep.subr.bf16.mxu0 0
        %190 = vmatpush1.bf16.xpose.msra.mxu0 0
        %191 = vmatprep.subr.bf16.mxu0 0
        %192 = vmatpush1.bf16.xpose.msra.mxu0 0
        %193 = vmatprep.subr.bf16.mxu0 0
        %194 = vmatpush1.bf16.xpose.msra.mxu0 0
        %195 = vmatprep.subr.bf16.mxu0 0
        %196 = vmatpush1.bf16.xpose.msra.mxu0 0
        %197 = vmatprep.subr.bf16.mxu0 0
        %198 = vmatpush1.bf16.xpose.msra.mxu0 0
        %199 = vmatprep.mubr.bf16.mxu0 0
        %200 = vmatmul.mubr.bf16.gmra.mrb[0].mxu0 %v162
        %v201 = vpop.f32.mrb[0].mxu0
        %v202 = vadd.f32 0.0, %v201
        %v203 = vpop.f32.mrb[0].mxu0
        %v204 = vpop.f32.mrb[0].mxu0
        %v205 = vpop.f32.mrb[0].mxu0
        %206 = vdwg.mxu0
        %v207 = vsel %vm160, %v202, -inf
        %208 = vmax.xlane.f32.xlu0 %v207
        %v209 = vpop.xlane.xlu0 %208
        %v210 = vsub.f32 %v202, %v209
        %v211 = vmul.f32 %v210, 1.442695
        %v212 = vpow.pop %v211
        %v213 = vsel %vm160, %v212, 0.0
        %214 = vadd.xlane.f32.xlu0 %v213
        %v215 = vpop.xlane.xlu0 %214
        %v216 = vrcp.pop %v215
        %v217 = vmul.f32 %v212, %v216
        %218 = vst.msk [vmem:[%s141] sm:$0xff] %vm160, %v217
        %v219 = vpack.c.bf16 %v217, %v217
        %220 = vrot.lane.b32.xlu0 %v157, 64
        %v221 = vpop.permute.xlu0 %220
        %v223 = vsel %vm160, %v219, 0
        %vm225 = vcmask 1043456
        %v227 = vsel %vm225, %v221, 0
        %229 = vmatprep.subr.bf16.mxu0 0
        %230 = vmatpush1.bf16.msra.mxu0 %v227
        %231 = vmatprep.subr.bf16.mxu0 0
        %232 = vmatpush1.bf16.msra.mxu0 0
        %233 = vmatprep.subr.bf16.mxu0 0
        %234 = vmatpush1.bf16.msra.mxu0 0
        %235 = vmatprep.subr.bf16.mxu0 0
        %236 = vmatpush1.bf16.msra.mxu0 0
        %237 = vmatprep.subr.bf16.mxu0 0
        %238 = vmatpush1.bf16.msra.mxu0 0
        %239 = vmatprep.subr.bf16.mxu0 0
        %240 = vmatpush1.bf16.msra.mxu0 0
        %241 = vmatprep.subr.bf16.mxu0 0
        %242 = vmatpush1.bf16.msra.mxu0 0
        %243 = vmatprep.subr.bf16.mxu0 0
        %244 = vmatpush1.bf16.msra.mxu0 0
        %245 = vmatprep.subr.bf16.mxu0 0
        %246 = vmatpush1.bf16.msra.mxu0 0
        %247 = vmatprep.subr.bf16.mxu0 0
        %248 = vmatpush1.bf16.msra.mxu0 0
        %249 = vmatprep.subr.bf16.mxu0 0
        %250 = vmatpush1.bf16.msra.mxu0 0
        %251 = vmatprep.subr.bf16.mxu0 0
        %252 = vmatpush1.bf16.msra.mxu0 0
        %253 = vmatprep.subr.bf16.mxu0 0
        %254 = vmatpush1.bf16.msra.mxu0 0
        %255 = vmatprep.subr.bf16.mxu0 0
        %256 = vmatpush1.bf16.msra.mxu0 0
        %257 = vmatprep.subr.bf16.mxu0 0
        %258 = vmatpush1.bf16.msra.mxu0 0
        %259 = vmatprep.subr.bf16.mxu0 0
        %260 = vmatpush1.bf16.msra.mxu0 0
        %261 = vmatprep.mubr.bf16.mxu0 0
        %262 = vmatmul.mubr.bf16.gmra.mrb[0].mxu0 %v223
        %v263 = vpop.f32.mrb[0].mxu0
        %v264 = vadd.f32 0.0, %v263
        %v265 = vpop.f32.mrb[0].mxu0
        %v266 = vpop.f32.mrb[0].mxu0
        %v267 = vpop.f32.mrb[0].mxu0
        %268 = vdwg.mxu0
        %270 = vrot.lane.b32.xlu0 %v154, 120
        %v271 = vpop.permute.xlu0 %270
        %272 = vrot.lane.b32.xlu0 %v157, 88
        %v273 = vpop.permute.xlu0 %272
        %v275 = vsel %vm160, %v271, 0
        %v278 = vsel %vm160, %v273, 0
        %280 = vmatprep.subr.bf16.mxu0 0
        %281 = vmatpush1.bf16.xpose.msra.mxu0 %v278
        %282 = vmatprep.subr.bf16.mxu0 0
        %283 = vmatpush1.bf16.xpose.msra.mxu0 0
        %284 = vmatprep.subr.bf16.mxu0 0
        %285 = vmatpush1.bf16.xpose.msra.mxu0 0
        %286 = vmatprep.subr.bf16.mxu0 0
        %287 = vmatpush1.bf16.xpose.msra.mxu0 0
        %288 = vmatprep.subr.bf16.mxu0 0
        %289 = vmatpush1.bf16.xpose.msra.mxu0 0
        %290 = vmatprep.subr.bf16.mxu0 0
        %291 = vmatpush1.bf16.xpose.msra.mxu0 0
        %292 = vmatprep.subr.bf16.mxu0 0
        %293 = vmatpush1.bf16.xpose.msra.mxu0 0
        %294 = vmatprep.subr.bf16.mxu0 0
        %295 = vmatpush1.bf16.xpose.msra.mxu0 0
        %296 = vmatprep.subr.bf16.mxu0 0
        %297 = vmatpush1.bf16.xpose.msra.mxu0 0
        %298 = vmatprep.subr.bf16.mxu0 0
        %299 = vmatpush1.bf16.xpose.msra.mxu0 0
        %300 = vmatprep.subr.bf16.mxu0 0
        %301 = vmatpush1.bf16.xpose.msra.mxu0 0
        %302 = vmatprep.subr.bf16.mxu0 0
        %303 = vmatpush1.bf16.xpose.msra.mxu0 0
        %304 = vmatprep.subr.bf16.mxu0 0
        %305 = vmatpush1.bf16.xpose.msra.mxu0 0
        %306 = vmatprep.subr.bf16.mxu0 0
        %307 = vmatpush1.bf16.xpose.msra.mxu0 0
        %308 = vmatprep.subr.bf16.mxu0 0
        %309 = vmatpush1.bf16.xpose.msra.mxu0 0
        %310 = vmatprep.subr.bf16.mxu0 0
        %311 = vmatpush1.bf16.xpose.msra.mxu0 0
        %312 = vmatprep.mubr.bf16.mxu0 0
        %313 = vmatmul.mubr.bf16.gmra.mrb[0].mxu0 %v275
        %v314 = vpop.f32.mrb[0].mxu0
        %v315 = vadd.f32 0.0, %v314
        %v316 = vpop.f32.mrb[0].mxu0
        %v317 = vpop.f32.mrb[0].mxu0
        %v318 = vpop.f32.mrb[0].mxu0
        %319 = vdwg.mxu0
        %v320 = vsel %vm160, %v315, -inf
        %321 = vmax.xlane.f32.xlu0 %v320
        %v322 = vpop.xlane.xlu0 %321
        %v323 = vsub.f32 %v315, %v322
        %v324 = vmul.f32 %v323, 1.442695
        %v325 = vpow.pop %v324
        %v326 = vsel %vm160, %v325, 0.0
        %327 = vadd.xlane.f32.xlu0 %v326
        %v328 = vpop.xlane.xlu0 %327
        %v329 = vrcp.pop %v328
        %v330 = vmul.f32 %v325, %v329
        %s331 = scalar_lea.vmem %s141, 8 [#allocation2]
        %332 = vst.msk [vmem:[%s331] sm:$0xff] %vm160, %v330
        %v333 = vpack.c.bf16 %v330, %v330
        %334 = vrot.lane.b32.xlu0 %v157, 56
        %v335 = vpop.permute.xlu0 %334
        %v337 = vsel %vm160, %v333, 0
        %v340 = vsel %vm225, %v335, 0
        %342 = vmatprep.subr.bf16.mxu0 0
        %343 = vmatpush1.bf16.msra.mxu0 %v340
        %344 = vmatprep.subr.bf16.mxu0 0
        %345 = vmatpush1.bf16.msra.mxu0 0
        %346 = vmatprep.subr.bf16.mxu0 0
        %347 = vmatpush1.bf16.msra.mxu0 0
        %348 = vmatprep.subr.bf16.mxu0 0
        %349 = vmatpush1.bf16.msra.mxu0 0
        %350 = vmatprep.subr.bf16.mxu0 0
        %351 = vmatpush1.bf16.msra.mxu0 0
        %352 = vmatprep.subr.bf16.mxu0 0
        %353 = vmatpush1.bf16.msra.mxu0 0
        %354 = vmatprep.subr.bf16.mxu0 0
        %355 = vmatpush1.bf16.msra.mxu0 0
        %356 = vmatprep.subr.bf16.mxu0 0
        %357 = vmatpush1.bf16.msra.mxu0 0
        %358 = vmatprep.subr.bf16.mxu0 0
        %359 = vmatpush1.bf16.msra.mxu0 0
        %360 = vmatprep.subr.bf16.mxu0 0
        %361 = vmatpush1.bf16.msra.mxu0 0
        %362 = vmatprep.subr.bf16.mxu0 0
        %363 = vmatpush1.bf16.msra.mxu0 0
        %364 = vmatprep.subr.bf16.mxu0 0
        %365 = vmatpush1.bf16.msra.mxu0 0
        %366 = vmatprep.subr.bf16.mxu0 0
        %367 = vmatpush1.bf16.msra.mxu0 0
        %368 = vmatprep.subr.bf16.mxu0 0
        %369 = vmatpush1.bf16.msra.mxu0 0
        %370 = vmatprep.subr.bf16.mxu0 0
        %371 = vmatpush1.bf16.msra.mxu0 0
        %372 = vmatprep.subr.bf16.mxu0 0
        %373 = vmatpush1.bf16.msra.mxu0 0
        %374 = vmatprep.mubr.bf16.mxu0 0
        %375 = vmatmul.mubr.bf16.gmra.mrb[0].mxu0 %v337
        %v376 = vpop.f32.mrb[0].mxu0
        %v377 = vadd.f32 0.0, %v376
        %v378 = vpop.f32.mrb[0].mxu0
        %v379 = vpop.f32.mrb[0].mxu0
        %v380 = vpop.f32.mrb[0].mxu0
        %381 = vdwg.mxu0
        %382 = vrot.lane.b32.xlu0 %v154, 112
        %v383 = vpop.permute.xlu0 %382
        %384 = vrot.lane.b32.xlu0 %v157, 80
        %v385 = vpop.permute.xlu0 %384
        %v387 = vsel %vm160, %v383, 0
        %v390 = vsel %vm160, %v385, 0
        %392 = vmatprep.subr.bf16.mxu0 0
        %393 = vmatpush1.bf16.xpose.msra.mxu0 %v390
        %394 = vmatprep.subr.bf16.mxu0 0
        %395 = vmatpush1.bf16.xpose.msra.mxu0 0
        %396 = vmatprep.subr.bf16.mxu0 0
        %397 = vmatpush1.bf16.xpose.msra.mxu0 0
        %398 = vmatprep.subr.bf16.mxu0 0
        %399 = vmatpush1.bf16.xpose.msra.mxu0 0
        %400 = vmatprep.subr.bf16.mxu0 0
        %401 = vmatpush1.bf16.xpose.msra.mxu0 0
        %402 = vmatprep.subr.bf16.mxu0 0
        %403 = vmatpush1.bf16.xpose.msra.mxu0 0
        %404 = vmatprep.subr.bf16.mxu0 0
        %405 = vmatpush1.bf16.xpose.msra.mxu0 0
        %406 = vmatprep.subr.bf16.mxu0 0
        %407 = vmatpush1.bf16.xpose.msra.mxu0 0
        %408 = vmatprep.subr.bf16.mxu0 0
        %409 = vmatpush1.bf16.xpose.msra.mxu0 0
        %410 = vmatprep.subr.bf16.mxu0 0
        %411 = vmatpush1.bf16.xpose.msra.mxu0 0
        %412 = vmatprep.subr.bf16.mxu0 0
        %413 = vmatpush1.bf16.xpose.msra.mxu0 0
        %414 = vmatprep.subr.bf16.mxu0 0
        %415 = vmatpush1.bf16.xpose.msra.mxu0 0
        %416 = vmatprep.subr.bf16.mxu0 0
        %417 = vmatpush1.bf16.xpose.msra.mxu0 0
        %418 = vmatprep.subr.bf16.mxu0 0
        %419 = vmatpush1.bf16.xpose.msra.mxu0 0
        %420 = vmatprep.subr.bf16.mxu0 0
        %421 = vmatpush1.bf16.xpose.msra.mxu0 0
        %422 = vmatprep.subr.bf16.mxu0 0
        %423 = vmatpush1.bf16.xpose.msra.mxu0 0
        %424 = vmatprep.mubr.bf16.mxu0 0
        %425 = vmatmul.mubr.bf16.gmra.mrb[0].mxu0 %v387
        %v426 = vpop.f32.mrb[0].mxu0
        %v427 = vadd.f32 0.0, %v426
        %v428 = vpop.f32.mrb[0].mxu0
        %v429 = vpop.f32.mrb[0].mxu0
        %v430 = vpop.f32.mrb[0].mxu0
        %431 = vdwg.mxu0
        %v432 = vsel %vm160, %v427, -inf
        %433 = vmax.xlane.f32.xlu0 %v432
        %v434 = vpop.xlane.xlu0 %433
        %v435 = vsub.f32 %v427, %v434
        %v436 = vmul.f32 %v435, 1.442695
        %v437 = vpow.pop %v436
        %v438 = vsel %vm160, %v437, 0.0
        %439 = vadd.xlane.f32.xlu0 %v438
        %v440 = vpop.xlane.xlu0 %439
        %v441 = vrcp.pop %v440
        %v442 = vmul.f32 %v437, %v441
        %s443 = scalar_lea.vmem %s141, 16 [#allocation2]
        %444 = vst.msk [vmem:[%s443] sm:$0xff] %vm160, %v442
        %v445 = vpack.c.bf16 %v442, %v442
        %446 = vrot.lane.b32.xlu0 %v157, 48
        %v447 = vpop.permute.xlu0 %446
        %v449 = vsel %vm160, %v445, 0
        %v452 = vsel %vm225, %v447, 0
        %454 = vmatprep.subr.bf16.mxu0 0
        %455 = vmatpush1.bf16.msra.mxu0 %v452
        %456 = vmatprep.subr.bf16.mxu0 0
        %457 = vmatpush1.bf16.msra.mxu0 0
        %458 = vmatprep.subr.bf16.mxu0 0
        %459 = vmatpush1.bf16.msra.mxu0 0
        %460 = vmatprep.subr.bf16.mxu0 0
        %461 = vmatpush1.bf16.msra.mxu0 0
        %462 = vmatprep.subr.bf16.mxu0 0
        %463 = vmatpush1.bf16.msra.mxu0 0
        %464 = vmatprep.subr.bf16.mxu0 0
        %465 = vmatpush1.bf16.msra.mxu0 0
        %466 = vmatprep.subr.bf16.mxu0 0
        %467 = vmatpush1.bf16.msra.mxu0 0
        %468 = vmatprep.subr.bf16.mxu0 0
        %469 = vmatpush1.bf16.msra.mxu0 0
        %470 = vmatprep.subr.bf16.mxu0 0
        %471 = vmatpush1.bf16.msra.mxu0 0
        %472 = vmatprep.subr.bf16.mxu0 0
        %473 = vmatpush1.bf16.msra.mxu0 0
        %474 = vmatprep.subr.bf16.mxu0 0
        %475 = vmatpush1.bf16.msra.mxu0 0
        %476 = vmatprep.subr.bf16.mxu0 0
        %477 = vmatpush1.bf16.msra.mxu0 0
        %478 = vmatprep.subr.bf16.mxu0 0
        %479 = vmatpush1.bf16.msra.mxu0 0
        %480 = vmatprep.subr.bf16.mxu0 0
        %481 = vmatpush1.bf16.msra.mxu0 0
        %482 = vmatprep.subr.bf16.mxu0 0
        %483 = vmatpush1.bf16.msra.mxu0 0
        %484 = vmatprep.subr.bf16.mxu0 0
        %485 = vmatpush1.bf16.msra.mxu0 0
        %486 = vmatprep.mubr.bf16.mxu0 0
        %487 = vmatmul.mubr.bf16.gmra.mrb[0].mxu0 %v449
        %v488 = vpop.f32.mrb[0].mxu0
        %v489 = vadd.f32 0.0, %v488
        %v490 = vpop.f32.mrb[0].mxu0
        %v491 = vpop.f32.mrb[0].mxu0
        %v492 = vpop.f32.mrb[0].mxu0
        %493 = vdwg.mxu0
        %494 = vrot.lane.b32.xlu0 %v154, 104
        %v495 = vpop.permute.xlu0 %494
        %496 = vrot.lane.b32.xlu0 %v157, 72
        %v497 = vpop.permute.xlu0 %496
        %v499 = vsel %vm160, %v495, 0
        %v502 = vsel %vm160, %v497, 0
        %504 = vmatprep.subr.bf16.mxu0 0
        %505 = vmatpush1.bf16.xpose.msra.mxu0 %v502
        %506 = vmatprep.subr.bf16.mxu0 0
        %507 = vmatpush1.bf16.xpose.msra.mxu0 0
        %508 = vmatprep.subr.bf16.mxu0 0
        %509 = vmatpush1.bf16.xpose.msra.mxu0 0
        %510 = vmatprep.subr.bf16.mxu0 0
        %511 = vmatpush1.bf16.xpose.msra.mxu0 0
        %512 = vmatprep.subr.bf16.mxu0 0
        %513 = vmatpush1.bf16.xpose.msra.mxu0 0
        %514 = vmatprep.subr.bf16.mxu0 0
        %515 = vmatpush1.bf16.xpose.msra.mxu0 0
        %516 = vmatprep.subr.bf16.mxu0 0
        %517 = vmatpush1.bf16.xpose.msra.mxu0 0
        %518 = vmatprep.subr.bf16.mxu0 0
        %519 = vmatpush1.bf16.xpose.msra.mxu0 0
        %520 = vmatprep.subr.bf16.mxu0 0
        %521 = vmatpush1.bf16.xpose.msra.mxu0 0
        %522 = vmatprep.subr.bf16.mxu0 0
        %523 = vmatpush1.bf16.xpose.msra.mxu0 0
        %524 = vmatprep.subr.bf16.mxu0 0
        %525 = vmatpush1.bf16.xpose.msra.mxu0 0
        %526 = vmatprep.subr.bf16.mxu0 0
        %527 = vmatpush1.bf16.xpose.msra.mxu0 0
        %528 = vmatprep.subr.bf16.mxu0 0
        %529 = vmatpush1.bf16.xpose.msra.mxu0 0
        %530 = vmatprep.subr.bf16.mxu0 0
        %531 = vmatpush1.bf16.xpose.msra.mxu0 0
        %532 = vmatprep.subr.bf16.mxu0 0
        %533 = vmatpush1.bf16.xpose.msra.mxu0 0
        %534 = vmatprep.subr.bf16.mxu0 0
        %535 = vmatpush1.bf16.xpose.msra.mxu0 0
        %536 = vmatprep.mubr.bf16.mxu0 0
        %537 = vmatmul.mubr.bf16.gmra.mrb[0].mxu0 %v499
        %v538 = vpop.f32.mrb[0].mxu0
        %v539 = vadd.f32 0.0, %v538
        %v540 = vpop.f32.mrb[0].mxu0
        %v541 = vpop.f32.mrb[0].mxu0
        %v542 = vpop.f32.mrb[0].mxu0
        %543 = vdwg.mxu0
        %v544 = vsel %vm160, %v539, -inf
        %545 = vmax.xlane.f32.xlu0 %v544
        %v546 = vpop.xlane.xlu0 %545
        %v547 = vsub.f32 %v539, %v546
        %v548 = vmul.f32 %v547, 1.442695
        %v549 = vpow.pop %v548
        %v550 = vsel %vm160, %v549, 0.0
        %551 = vadd.xlane.f32.xlu0 %v550
        %v552 = vpop.xlane.xlu0 %551
        %v553 = vrcp.pop %v552
        %v554 = vmul.f32 %v549, %v553
        %s555 = scalar_lea.vmem %s141, 24 [#allocation2]
        %556 = vst.msk [vmem:[%s555] sm:$0xff] %vm160, %v554
        %v557 = vpack.c.bf16 %v554, %v554
        %558 = vrot.lane.b32.xlu0 %v157, 40
        %v559 = vpop.permute.xlu0 %558
        %v561 = vsel %vm160, %v557, 0
        %v564 = vsel %vm225, %v559, 0
        %566 = vmatprep.subr.bf16.mxu0 0
        %567 = vmatpush1.bf16.msra.mxu0 %v564
        %568 = vmatprep.subr.bf16.mxu0 0
        %569 = vmatpush1.bf16.msra.mxu0 0
        %570 = vmatprep.subr.bf16.mxu0 0
        %571 = vmatpush1.bf16.msra.mxu0 0
        %572 = vmatprep.subr.bf16.mxu0 0
        %573 = vmatpush1.bf16.msra.mxu0 0
        %574 = vmatprep.subr.bf16.mxu0 0
        %575 = vmatpush1.bf16.msra.mxu0 0
        %576 = vmatprep.subr.bf16.mxu0 0
        %577 = vmatpush1.bf16.msra.mxu0 0
        %578 = vmatprep.subr.bf16.mxu0 0
        %579 = vmatpush1.bf16.msra.mxu0 0
        %580 = vmatprep.subr.bf16.mxu0 0
        %581 = vmatpush1.bf16.msra.mxu0 0
        %582 = vmatprep.subr.bf16.mxu0 0
        %583 = vmatpush1.bf16.msra.mxu0 0
        %584 = vmatprep.subr.bf16.mxu0 0
        %585 = vmatpush1.bf16.msra.mxu0 0
        %586 = vmatprep.subr.bf16.mxu0 0
        %587 = vmatpush1.bf16.msra.mxu0 0
        %588 = vmatprep.subr.bf16.mxu0 0
        %589 = vmatpush1.bf16.msra.mxu0 0
        %590 = vmatprep.subr.bf16.mxu0 0
        %591 = vmatpush1.bf16.msra.mxu0 0
        %592 = vmatprep.subr.bf16.mxu0 0
        %593 = vmatpush1.bf16.msra.mxu0 0
        %594 = vmatprep.subr.bf16.mxu0 0
        %595 = vmatpush1.bf16.msra.mxu0 0
        %596 = vmatprep.subr.bf16.mxu0 0
        %597 = vmatpush1.bf16.msra.mxu0 0
        %598 = vmatprep.mubr.bf16.mxu0 0
        %599 = vmatmul.mubr.bf16.gmra.mrb[0].mxu0 %v561
        %v600 = vpop.f32.mrb[0].mxu0
        %v601 = vadd.f32 0.0, %v600
        %v602 = vpop.f32.mrb[0].mxu0
        %v603 = vpop.f32.mrb[0].mxu0
        %v604 = vpop.f32.mrb[0].mxu0
        %605 = vdwg.mxu0
        %607 = vrot.lane.b32.xlu0 %v377, 8
        %v608 = vpop.permute.xlu0 %607
        %611 = vrot.lane.b32.xlu0 %v489, 16
        %v612 = vpop.permute.xlu0 %611
        %615 = vrot.lane.b32.xlu0 %v601, 24
        %v616 = vpop.permute.xlu0 %615
        %v618 = vsel %vm160, %v264, %v608
        %vm619 = vcmask 130048
        %v620 = vsel %vm619, %v618, %v612
        %vm621 = vcmask 195584
        %v622 = vsel %vm621, %v620, %v616
        %v623 = vpack.c.bf16 %v622, %v622
        %vm624 = vcmask 257024
        %625 = vst.msk [vmem:[%s149] sm:$0xf] %vm624, %v623
        %p626 = scmp.lt.s32.totalorder %s17, 1
        %s627 = scalar_select %p626, %s17, 1
        %s628 = smul.addr %s627, 4
        %s629 = scalar_lea.vmem %s1, %s628
        %s630 = sand.u32 %s77, 1
        %s631 = scalar_lea.sflag [#allocation3], %s630
        %s632 = sand.u32 %s77, 1
        %s633 = smul.addr %s632, 32
        %s634 = scalar_lea.vmem [#allocation2], %s633
        // Predicated region
        $region25: #{attention_forward.4} parent=23 // pred_check
          %p635 = pneg %p61
        $region26: #{attention_forward.4} parent=23 // pred_check_branch
          %637 = sbr.rel (%p635) target = $region28
        $region27: #{attention_forward.4} parent=23 // pred_region
          _
        $region28: #{attention_forward.4} parent=23 // pred_fallthru
          _
        // Predicated region
        $region29: #{attention_forward.4} parent=23 // pred_check
          %p638 = pneg %p87
        $region30: #{attention_forward.4} parent=23 // pred_check_branch
          %640 = sbr.rel (%p638) target = $region32
        $region31: #{attention_forward.4} parent=23 // pred_region
          %s642 = ssub.s32 512, 512
          %643 = vsyncadd %s631, %s642
          %s644 = smul.addr %s17, 4
          %s645 = smul.addr %s644, 128
          %s646 = scalar_lea.hbm %s2, %s645
          %s647 = sshll.u32 %s634, 4
          %s648 = int_to_ptr.vmem [resolvable:$true] %s647
          %653 = dma.vmem_to_hbm [thread:$0]  %s648, 512, %s646, %s631, 128, 128, 8
        $region32: #{attention_forward.4} parent=23 // pred_fallthru
          _
      $region24: #{attention_forward.4} parent=5 // pred_fallthru
        _
      %p654 = scmp.le.s32.totalorder 2, %s12
      // Predicated region
      $region33: #{attention_forward.4} parent=5 // pred_check
        %p655 = pneg %p654
      $region34: #{attention_forward.4} parent=5 // pred_check_branch
        %657 = sbr.rel (%p655) target = $region36
      $region35: #{attention_forward.4} parent=5 // pred_region
        %s658 = ssub.s32 %s12, 2
        // Predicated region
        $region37: #{attention_forward.4} parent=35 // pred_check
          %p659 = pneg %p67
        $region38: #{attention_forward.4} parent=35 // pred_check_branch
          %661 = sbr.rel (%p659) target = $region40
        $region39: #{attention_forward.4} parent=35 // pred_region
          %p662 = scmp.lt.s32.totalorder %s18, 1
          %s663 = scalar_select %p662, %s18, 1
          %s664 = smul.addr %s663, 4
          %s665 = scalar_lea.vmem %s1, %s664
        $region40: #{attention_forward.4} parent=35 // pred_fallthru
          _
        // Predicated region
        $region41: #{attention_forward.4} parent=35 // pred_check
          %p666 = pneg %p93
        $region42: #{attention_forward.4} parent=35 // pred_check_branch
          %668 = sbr.rel (%p666) target = $region44
        $region43: #{attention_forward.4} parent=35 // pred_region
          %s669 = sand.u32 %s78, 1
          %s670 = scalar_lea.sflag [#allocation3], %s669
          %s671 = sand.u32 %s78, 1
          %s672 = smul.addr %s671, 32
          %s673 = scalar_lea.vmem [#allocation2], %s672
          %674 = dma.done %s670, 512
        $region44: #{attention_forward.4} parent=35 // pred_fallthru
          _
      $region36: #{attention_forward.4} parent=5 // pred_fallthru
        _
    $region6: #{attention_forward.4} parent=1 // loop_footer
      %s16 = sadd.s32 1, %s12
    $region7: #{attention_forward.4} parent=1 // loop_footer_branch
      %11 = sbr.rel target = $region3
    $region8: #{attention_forward.4} parent=1 // loop_exit
      _
    %675 = vsyncpa [#allocation3], 1
    %s676 = scalar_lea.sflag [#allocation3], 1
    %677 = vsyncpa %s676, 1

</llo_original>
